<compile_context>
chip_gen: v5e
topology: v5e:2x2
jax: 0.10.0
libtpu: 0.0.40
codegen_flags: <defaults>
</compile_context>

<pallas_src>
import jax
import jax.numpy as jnp
from jax import lax
from jax.experimental import pallas as pl
from jax.experimental.pallas import tpu as pltpu

BN_EPS = 1e-5          # nn.BatchNorm2d default
LANE = 128


def _stats_kernel(x_ref, sum_ref, sq_ref):
    # x_ref: (rb, Sp)   sum_ref/sq_ref: (rb, 1)
    x = x_ref[...].astype(jnp.float32)
    sum_ref[...] = jnp.sum(x, axis=-1, keepdims=True)
    sq_ref[...] = jnp.sum(x * x, axis=-1, keepdims=True)


def _apply_kernel(x_ref, p_ref, o_ref):
    # x_ref: (rb, Sp)   p_ref: (rb, 2) packed [a, d]   o_ref: (rb, Sp)
    x = x_ref[...].astype(jnp.float32)
    p = p_ref[...]
    a = p[:, 0:1]                      # per-row scale * rsqrt(var + eps)
    d = p[:, 1:2]                      # per-row bias  - mean * a
    o_ref[...] = (x * a + d).astype(o_ref.dtype)


def _round_up(v, m):
    return (v + m - 1) // m * m


def _pick_row_block(r_rows, s_lanes, itemsize, tile_budget_bytes, sublane):
    """Row block from a VMEM byte budget (memory-bound kernel: big lane-dense tiles)."""
    r_aligned = _round_up(r_rows, sublane)
    rb = (tile_budget_bytes // max(1, s_lanes * itemsize)) // sublane * sublane
    rb = max(sublane, min(rb, r_aligned))
    # Give both v7x TensorCores work (>= 2 grid steps) whenever there are enough rows.
    if pl.cdiv(r_aligned, rb) < 2 and r_aligned >= 2 * sublane:
        rb = max(sublane, (r_aligned // 2) // sublane * sublane)
    return rb


def adaptive_batch_norm(x, style, scale_w, scale_b, bias_w, bias_b,
                        *, eps=BN_EPS, tile_budget_bytes=2 * 1024 * 1024):
    """x: (B, C, *spatial).  style: (B, A).
    scale_w/bias_w: (C, A), scale_b/bias_b: (C,)   (PyTorch nn.Linear layout)."""
    B, C = x.shape[0], x.shape[1]
    S = 1
    for d in x.shape[2:]:
        S *= d
    R = B * C
    dtype = x.dtype
    itemsize = jnp.dtype(dtype).itemsize
    sublane = {4: 8, 2: 16, 1: 32}.get(itemsize, 8)

    # --- lane-dense spatial axis: zero-pad S up to a multiple of 128 (mean uses true S) ---
    Sp = _round_up(S, LANE)
    x_flat = x.reshape(R, S)
    if Sp != S:
        x_flat = jnp.pad(x_flat, ((0, 0), (0, Sp - S)))

    # --- row blocking from a VMEM byte budget; cdiv grid + row padding (no rb=R cliff) ---
    rb = _pick_row_block(R, Sp, itemsize, tile_budget_bytes, sublane)
    n_steps = pl.cdiv(R, rb)
    R_pad = n_steps * rb
    if R_pad != R:
        x_flat = jnp.pad(x_flat, ((0, R_pad - R), (0, 0)))

    tile_bytes = rb * Sp * itemsize
    vmem_limit = int(min(48 * 1024 * 1024, max(16 * 1024 * 1024, 8 * tile_bytes)))
    cparams = pltpu.CompilerParams(dimension_semantics=("parallel",),
                                   vmem_limit_bytes=vmem_limit)

    # --- pass 1: per-row sum / sum-of-squares ---
    row_sum, row_sq = pl.pallas_call(
        _stats_kernel,
        out_shape=(jax.ShapeDtypeStruct((R_pad, 1), jnp.float32),
                   jax.ShapeDtypeStruct((R_pad, 1), jnp.float32)),
        grid_spec=pltpu.PrefetchScalarGridSpec(
            num_scalar_prefetch=0,
            grid=(n_steps,),
            in_specs=[pl.BlockSpec((rb, Sp), lambda i: (i, 0))],
            out_specs=(pl.BlockSpec((rb, 1), lambda i: (i, 0)),
                       pl.BlockSpec((rb, 1), lambda i: (i, 0)))),
        compiler_params=cparams,
    )(x_flat)

    # --- tiny glue (O(B*C) values): channel stats, style linears, fold into per-row (a, d) ---
    n = jnp.float32(B * S)                                   # true element count per channel
    ch_sum = row_sum[:R, 0].reshape(B, C).sum(axis=0)
    ch_sq = row_sq[:R, 0].reshape(B, C).sum(axis=0)
    ch_mean = ch_sum / n
    ch_var = jnp.maximum(ch_sq / n - ch_mean * ch_mean, 0.0)
    inv_std = lax.rsqrt(ch_var + eps)                        # (C,)

    hp = lax.Precision.HIGHEST
    ada_scale = jnp.dot(style, scale_w.T, precision=hp,
                        preferred_element_type=jnp.float32) + scale_b
    ada_scale = ada_scale - ada_scale.mean(axis=1, keepdims=True) + 1.0    # (B, C)
    ada_bias = jnp.dot(style, bias_w.T, precision=hp,
                       preferred_element_type=jnp.float32) + bias_b
    ada_bias = ada_bias - ada_bias.mean(axis=1, keepdims=True)             # (B, C)

    a = ada_scale * inv_std[None, :]                         # (B, C)
    d = ada_bias - ch_mean[None, :] * a                      # (B, C)
    params = jnp.stack([a.reshape(R), d.reshape(R)], axis=-1).astype(jnp.float32)  # (R, 2)
    if R_pad != R:
        params = jnp.pad(params, ((0, R_pad - R), (0, 0)))

    # --- pass 2: out = x * a + d over large lane-dense row blocks (1 big + 1 tiny DMA / step) ---
    out_flat = pl.pallas_call(
        _apply_kernel,
        out_shape=jax.ShapeDtypeStruct((R_pad, Sp), dtype),
        grid_spec=pltpu.PrefetchScalarGridSpec(
            num_scalar_prefetch=0,
            grid=(n_steps,),
            in_specs=[pl.BlockSpec((rb, Sp), lambda i: (i, 0)),
                      pl.BlockSpec((rb, 2), lambda i: (i, 0))],
            out_specs=pl.BlockSpec((rb, Sp), lambda i: (i, 0))),
        compiler_params=cparams,
    )(x_flat, params)

    return out_flat[:R, :S].reshape(x.shape)


def _reference(x, style, scale_w, scale_b, bias_w, bias_b, eps=BN_EPS):
    # pure-JAX mirror of the PyTorch forward (training-mode BatchNorm2d, affine=False)
    mean = x.mean(axis=(0, 2, 3), keepdims=True)
    var = ((x - mean) ** 2).mean(axis=(0, 2, 3), keepdims=True)
    out = (x - mean) / jnp.sqrt(var + eps)
    hp = lax.Precision.HIGHEST
    scale = jnp.dot(style, scale_w.T, precision=hp,
                    preferred_element_type=jnp.float32) + scale_b
    scale = scale - scale.mean(axis=1, keepdims=True) + 1.0
    bias = jnp.dot(style, bias_w.T, precision=hp,
                   preferred_element_type=jnp.float32) + bias_b
    bias = bias - bias.mean(axis=1, keepdims=True)
    return scale[:, :, None, None] * out + bias[:, :, None, None]


if __name__ == "__main__":
    key = jax.random.PRNGKey(0)
    B, C, H, W, A = 2, 4, 16, 16, 8

    kx, ks, k1, k2, k3, k4 = jax.random.split(key, 6)
    x = jax.random.normal(kx, (B, C, H, W), dtype=jnp.float32)
    style = jax.random.normal(ks, (B, A), dtype=jnp.float32)

    # deterministic nn.Linear-style parameters (weight: (out, in), bias: (out,))
    lim = 1.0 / float(jnp.sqrt(jnp.float32(A)))
    scale_w = jax.random.uniform(k1, (C, A), jnp.float32, -lim, lim)
    scale_b = jax.random.uniform(k2, (C,), jnp.float32, -lim, lim)
    bias_w = jax.random.uniform(k3, (C, A), jnp.float32, -lim, lim)
    bias_b = jax.random.uniform(k4, (C,), jnp.float32, -lim, lim)

    out = adaptive_batch_norm(x, style, scale_w, scale_b, bias_w, bias_b)
    out = jax.block_until_ready(out)

    ref = _reference(x, style, scale_w, scale_b, bias_w, bias_b)
    assert out.shape == (B, C, H, W)
    assert jnp.allclose(out, ref, atol=1e-4, rtol=1e-4), "mismatch vs reference"

    print("KERNEL_OK")
</pallas_src>

<mosaic_0001>
module attributes {stable_mosaic.version = 11 : i64} {
  func.func @_stats_kernel(%arg0: i32, %arg1: memref<8x256xf32, #tpu.memory_space<vmem>>, %arg2: memref<8x1xf32, #tpu.memory_space<vmem>>, %arg3: memref<8x1xf32, #tpu.memory_space<vmem>>) attributes {dimension_semantics = [#tpu.dimension_semantics<parallel>], iteration_bounds = array<i64: 1>, scalar_prefetch = 0 : i64, scratch_operands = 0 : i64, tpu.core_type = #tpu.core_type<tc>, window_params = [{transform_indices = @transform_0, window_bounds = array<i64: 8, 256>}, {transform_indices = @transform_1, window_bounds = array<i64: 8, 1>}, {transform_indices = @transform_2, window_bounds = array<i64: 8, 1>}]} {
    %c0 = arith.constant 0 : index
    %c0_0 = arith.constant 0 : index
    %0 = vector.load %arg1[%c0, %c0_0] : memref<8x256xf32, #tpu.memory_space<vmem>>, vector<8x256xf32>
    %cst = arith.constant dense<0.000000e+00> : vector<8xf32>
    %1 = vector.multi_reduction <add>, %0, %cst [1] : vector<8x256xf32> to vector<8xf32>
    %2 = vector.shape_cast %1 : vector<8xf32> to vector<8x1xf32>
    %c0_1 = arith.constant 0 : index
    %c0_2 = arith.constant 0 : index
    %3 = vector.load %arg2[%c0_1, %c0_2] : memref<8x1xf32, #tpu.memory_space<vmem>>, vector<8x1xf32>
    tpu.vector_store %arg2[%c0_1, %c0_2], %2 {strides = array<i32>} : memref<8x1xf32, #tpu.memory_space<vmem>>, vector<8x1xf32>,
    %4 = arith.mulf %0, %0 : vector<8x256xf32>
    %cst_3 = arith.constant dense<0.000000e+00> : vector<8xf32>
    %5 = vector.multi_reduction <add>, %4, %cst_3 [1] : vector<8x256xf32> to vector<8xf32>
    %6 = vector.shape_cast %5 : vector<8xf32> to vector<8x1xf32>
    %c0_4 = arith.constant 0 : index
    %c0_5 = arith.constant 0 : index
    %7 = vector.load %arg3[%c0_4, %c0_5] : memref<8x1xf32, #tpu.memory_space<vmem>>, vector<8x1xf32>
    tpu.vector_store %arg3[%c0_4, %c0_5], %6 {strides = array<i32>} : memref<8x1xf32, #tpu.memory_space<vmem>>, vector<8x1xf32>,
    return
  }
  func.func @transform_0(%arg0: i32) -> (i32, i32) {
    %c0_i32 = arith.constant 0 : i32
    %c0_i32_0 = arith.constant 0 : i32
    return %arg0, %c0_i32 : i32, i32
  }
  func.func @transform_1(%arg0: i32) -> (i32, i32) {
    %c0_i32 = arith.constant 0 : i32
    %c0_i32_0 = arith.constant 0 : i32
    return %arg0, %c0_i32 : i32, i32
  }
  func.func @transform_2(%arg0: i32) -> (i32, i32) {
    %c0_i32 = arith.constant 0 : i32
    %c0_i32_0 = arith.constant 0 : i32
    return %arg0, %c0_i32 : i32, i32
  }
}

</mosaic_0001>

<llo_original>
// kernel: tpu_custom_call.1
$region0: #{tpu_custom_call.1}
  #allocation0 [shape = 'u32[]', space=smem, size = 0x4, offset = 0x4, fixed_abs, tag = 'smem constant byte address 0x4 - core index']
  #allocation1 [shape = 'u32[72,128]{1,0:T(1,128)}', space=vmem, size = 0x9000, scoped, tag = 'internal scratch']
  %s0 = inlined_call_operand.hbm [shape: f32[8,256], index: 0, kind: input, shape index: {}]
  %s1 = inlined_call_operand.vmem [shape: f32[8,1], index: 1, kind: output, shape index: {0}]
  %s2 = inlined_call_operand.vmem [shape: f32[8,1], index: 2, kind: output, shape index: {1}]
  %3 = xla_tuple %s1, %s2
  %s4 = sld [smem:[#allocation0]]
  $region26: #{tpu_custom_call.1} parent=0
    _
  %s6 = ssub.s32 1, %s4
  %s7 = scalar_select 0, %s6, %s4
  $region1: #{tpu_custom_call.1} parent=0
    #allocation2 [shape = 'u8[8192]{0}', space=vmem, size = 0x2000, scoped, tag = 'input window, operand 0, single buffered']
    #allocation3 [shape = 's32[1]{0}', space=sflag, size = 0x4, scoped, tag = 'scoped memory for tpu_custom_call.1']
    %8 = vsyncpa [#allocation3], 0
    // Predicated region
    $region2: #{tpu_custom_call.1} parent=1 // pred_check
      _
    $region3: #{tpu_custom_call.1} parent=1 // pred_check_branch
      %10 = sbr.rel (0) target = $region5
    $region4: #{tpu_custom_call.1} parent=1 // pred_region
      %12 = vsyncadd [#allocation3], 0
      %s14 = sshll.u32 %s0, 4
      %s15 = int_to_ptr.hbm [resolvable:$true] %s14
      %s16 = sshll.u32 [#allocation2], 4
      %s17 = int_to_ptr.vmem [resolvable:$true] %s16
      %19 = dma.hbm_to_vmem [thread:$0]  %s15, 256, %s17, [#allocation3]
    $region5: #{tpu_custom_call.1} parent=1 // pred_fallthru
      _
    // Predicated region
    $region6: #{tpu_custom_call.1} parent=1 // pred_check
      _
    $region7: #{tpu_custom_call.1} parent=1 // pred_check_branch
      %21 = sbr.rel (0) target = $region9
    $region8: #{tpu_custom_call.1} parent=1 // pred_region
      %23 = dma.done [#allocation3], 256
    $region9: #{tpu_custom_call.1} parent=1 // pred_fallthru
      _
    %v24 = vld [vmem:[#allocation2] sm:$0xff]
    %v25 = vld [vmem:[#allocation2 + $0x8] sm:$0xff]
    %v26 = vadd.f32 %v24, %v25
    %27 = vadd.xlane.f32.xlu0 %v26
    %v28 = vpop.xlane.xlu0 %27
    %vm29 = vcmask 7168
    %30 = vst.msk [vmem:[%s1] sm:$0xff] %vm29, %v28
    %v31 = vmul.f32 %v24, %v24
    %v32 = vmul.f32 %v25, %v25
    %v33 = vadd.f32 %v31, %v32
    %34 = vadd.xlane.f32.xlu0 %v33
    %v35 = vpop.xlane.xlu0 %34
    %36 = vst.msk [vmem:[%s2] sm:$0xff] %vm29, %v35
    // Predicated region
    $region10: #{tpu_custom_call.1} parent=1 // pred_check
      _
    $region11: #{tpu_custom_call.1} parent=1 // pred_check_branch
      %38 = sbr.rel (0) target = $region13
    $region12: #{tpu_custom_call.1} parent=1 // pred_region
      _
    $region13: #{tpu_custom_call.1} parent=1 // pred_fallthru
      _
    // Predicated region
    $region14: #{tpu_custom_call.1} parent=1 // pred_check
      _
    $region15: #{tpu_custom_call.1} parent=1 // pred_check_branch
      %40 = sbr.rel (0) target = $region17
    $region16: #{tpu_custom_call.1} parent=1 // pred_region
      _
    $region17: #{tpu_custom_call.1} parent=1 // pred_fallthru
      _
    // Predicated region
    $region18: #{tpu_custom_call.1} parent=1 // pred_check
      _
    $region19: #{tpu_custom_call.1} parent=1 // pred_check_branch
      %42 = sbr.rel (0) target = $region21
    $region20: #{tpu_custom_call.1} parent=1 // pred_region
      _
    $region21: #{tpu_custom_call.1} parent=1 // pred_fallthru
      _
    // Predicated region
    $region22: #{tpu_custom_call.1} parent=1 // pred_check
      _
    $region23: #{tpu_custom_call.1} parent=1 // pred_check_branch
      %44 = sbr.rel (0) target = $region25
    $region24: #{tpu_custom_call.1} parent=1 // pred_region
      _
    $region25: #{tpu_custom_call.1} parent=1 // pred_fallthru
      _
    %45 = vsyncpa [#allocation3], 1

</llo_original>
